<compile_context>
chip_gen: v7x
topology: tpu7x:2x2x1
jax: 0.10.0
libtpu: 0.0.40
codegen_flags: <defaults>
</compile_context>

<pallas_src>
import functools

import jax
import jax.numpy as jnp
from jax import lax
from jax.experimental import pallas as pl
from jax.experimental.pallas import tpu as pltpu


# ---------------------------------------------------------------------------
# One-time probes (cached): hardware rotate direction, Buffered(1) support.
# ---------------------------------------------------------------------------
def _roll_probe_kernel(x_ref, o_ref):
    o_ref[...] = pltpu.roll(x_ref[...], 1, axis=1)


@functools.lru_cache(maxsize=None)
def _roll_sign():
    """+1 if pltpu.roll follows the jnp.roll convention (result[i] = x[i - shift])."""
    x = jnp.arange(8 * 128, dtype=jnp.float32).reshape(8, 128)
    y = pl.pallas_call(
        _roll_probe_kernel,
        out_shape=jax.ShapeDtypeStruct((8, 128), jnp.float32))(x)
    return 1 if float(y[0, 0]) == 127.0 else -1


def _buffered_probe_kernel(x_ref, o_ref):
    o_ref[...] = x_ref[...] + 1.0


@functools.lru_cache(maxsize=None)
def _single_buffer_supported():
    """Whether this jax build accepts pipeline_mode=pl.Buffered(1) on TPU."""
    if not hasattr(pl, "Buffered"):
        return False
    try:
        x = jnp.zeros((8, 128), jnp.float32)
        y = pl.pallas_call(
            _buffered_probe_kernel,
            out_shape=jax.ShapeDtypeStruct((8, 128), jnp.float32),
            grid=(2,),
            in_specs=[pl.BlockSpec((8, 128), lambda i: (0, 0),
                                   pipeline_mode=pl.Buffered(1))],
            out_specs=pl.BlockSpec((8, 128), lambda i: (0, 0)),
        )(x)
        jax.block_until_ready(y)
        return True
    except Exception:
        return False


def _const_spec(shape):
    """BlockSpec for a grid-invariant operand; single-buffered when supported."""
    index_map = lambda g: (0,) * len(shape)
    if _single_buffer_supported():
        return pl.BlockSpec(shape, index_map, pipeline_mode=pl.Buffered(1))
    return pl.BlockSpec(shape, index_map)


# ---------------------------------------------------------------------------
# Fused block kernel (one group of G packed batch samples per grid step)
# ---------------------------------------------------------------------------
def _fused_block_kernel(x_ref, masks_ref, sel_ref, *conv_out_refs, W, roll_sign):
    # x_ref     : (1, C1, L)      concatenated [ll,lh,hl,hh], L = G*H*W lanes
    # masks_ref : (9, L)          f32 border masks, tiled per packed sample
    # sel_ref   : (L, L//4) bf16  0/1 matrix selecting the (even,even) lanes
    # conv_out_refs = (w_0, s_0, b_0, ..., w_{n-1}, s_{n-1}, b_{n-1}, o_ref)
    #   w_i: (Cout_i, 9*Cin_i) bf16 tap-major weights; s_i/b_i: (Cout_i, 1) f32
    # o_ref     : (1, Cout, L//4) f32, lane-dense (multiple of 128 lanes)
    L = x_ref.shape[-1]
    o_ref = conv_out_refs[-1]
    conv_refs = conv_out_refs[:-1]
    n_convs = len(conv_refs) // 3
    taps = [(dh, dw) for dh in (-1, 0, 1) for dw in (-1, 0, 1)]

    masks = masks_ref[...]                         # hoisted: one load, shared by all convs

    def shift(arr, d):
        # result[:, l] = arr[:, l + d] (circular over the packed lane axis; any
        # lane that wraps across a border / sample boundary is either zeroed by
        # a tap mask or discarded by the pool selector).
        if d == 0:
            return arr
        return pltpu.roll(arr, (-d * roll_sign) % L, axis=1)

    def conv3x3_bn_relu(xin, w_ref, s_ref, b_ref):
        cols = []
        for t, (dh, dw) in enumerate(taps):
            piece = shift(xin, dh * W + dw)
            if dh != 0 or dw != 0:                 # zero wrapped border lanes
                piece = piece * masks[t:t + 1, :]
            cols.append(piece)
        # TODO(synk): at wide channels switch to 9 accumulated per-tap matmuls
        # (y += W_tap @ piece) instead of materializing the 9x im2col buffer.
        xcol = jnp.concatenate(cols, axis=0).astype(jnp.bfloat16)   # (9*Cin, L)
        y = jnp.dot(w_ref[...], xcol,
                    preferred_element_type=jnp.float32)             # (Cout, L) f32 acc
        y = y * s_ref[...] + b_ref[...]            # folded conv-bias + BN (eval)
        return jnp.maximum(y, 0.0)                 # ReLU

    h = x_ref[0]                                   # (C1, L) f32
    for i in range(n_convs):
        w_ref, s_ref, b_ref = conv_refs[3 * i:3 * i + 3]
        h = conv3x3_bn_relu(h, w_ref, s_ref, b_ref)

    # 2x2 / stride-2 max pool: shift+max twice (VPU/XLU), then compact the kept
    # (even row, even col) lanes with a 0/1 selection matmul on the MXU.
    # TODO(synk): replace the O(HW^2) selection matrix with a strided lane
    # compaction before feature maps get large (it grows quadratically in H*W).
    h = jnp.maximum(h, shift(h, 1))                # max over (w, w+1)
    h = jnp.maximum(h, shift(h, W))                # max over (h, h+1)
    o_ref[0] = jnp.dot(h.astype(jnp.bfloat16), sel_ref[...],
                       preferred_element_type=jnp.float32)          # (Cout, L//4)


def _fused_block_call(x_packed, conv_params, masks, sel, *, W):
    """x_packed: (NG, C1, G*H*W) -> (NG, Cout, G*(H//2)*(W//2)) in one pallas_call."""
    NG, C1, L = x_packed.shape
    Cout = conv_params[-1][0].shape[0]
    Lo = sel.shape[1]

    kernel = functools.partial(_fused_block_kernel, W=W, roll_sign=_roll_sign())

    in_specs = [
        pl.BlockSpec((1, C1, L), lambda g: (g, 0, 0)),
        _const_spec(masks.shape),
        _const_spec(sel.shape),
    ]
    args = [x_packed, masks, sel]
    for w, s, b in conv_params:
        in_specs += [_const_spec(w.shape), _const_spec(s.shape), _const_spec(b.shape)]
        args += [w, s, b]

    return pl.pallas_call(
        kernel,
        out_shape=jax.ShapeDtypeStruct((NG, Cout, Lo), jnp.float32),
        grid=(NG,),
        in_specs=in_specs,
        out_specs=pl.BlockSpec((1, Cout, Lo), lambda g: (g, 0, 0)),
        # TODO(synk): when H*W/channels grow, add a spatial-band grid axis with
        # halo masks and raise vmem_limit_bytes (v7x: 64 MiB VMEM, v5e: 16 MiB
        # default scoped); not needed at this working-set size (<1 MiB).
        compiler_params=pltpu.CompilerParams(
            dimension_semantics=("parallel",)),
    )(*args)


# ---------------------------------------------------------------------------
# Host-side constants and parameter folding
# ---------------------------------------------------------------------------
def _tap_masks(H, W):
    r = jnp.arange(H, dtype=jnp.int32)[:, None]
    c = jnp.arange(W, dtype=jnp.int32)[None, :]
    rows = []
    for dh in (-1, 0, 1):
        for dw in (-1, 0, 1):
            ok = (r + dh >= 0) & (r + dh < H) & (c + dw >= 0) & (c + dw < W)
            rows.append(ok.reshape(H * W))
    return jnp.stack(rows).astype(jnp.float32)                # (9, H*W)


def _pool_selector(H, W, G):
    # 0/1 matrix compacting the kept (even row, even col) lanes of each packed
    # sample into a dense (Cout, G*Ho*Wo) output slab via one MXU matmul.
    HW = H * W
    Ho, Wo = H // 2, W // 2
    HoWo = Ho * Wo
    m = jnp.arange(G * HoWo, dtype=jnp.int32)
    g, mm = m // HoWo, m % HoWo
    src = g * HW + 2 * (mm // Wo) * W + 2 * (mm % Wo)
    l = jnp.arange(G * HW, dtype=jnp.int32)
    return (l[:, None] == src[None, :]).astype(jnp.float32)   # (G*HW, G*HoWo)


def _make_conv_bn_params(key, cin, cout, eps=1e-5):
    ks = jax.random.split(key, 6)
    w = 0.1 * jax.random.normal(ks[0], (3, 3, cin, cout), jnp.float32)  # HWIO
    b = 0.1 * jax.random.normal(ks[1], (cout,), jnp.float32)            # conv bias
    gamma = 1.0 + 0.1 * jax.random.normal(ks[2], (cout,), jnp.float32)
    beta = 0.1 * jax.random.normal(ks[3], (cout,), jnp.float32)
    mean = 0.1 * jax.random.normal(ks[4], (cout,), jnp.float32)
    var = 1.0 + 0.1 * jax.random.uniform(ks[5], (cout,), jnp.float32)
    scale = gamma / jnp.sqrt(var + eps)
    bias = scale * (b - mean) + beta
    return dict(w=w, scale=scale, bias=bias)


def _flatten_hwio(w):
    # HWIO (3,3,Cin,Cout) -> (Cout, 9*Cin), tap-major, matching the kernel's im2col.
    kh, kw, cin, cout = w.shape
    return jnp.transpose(w, (3, 0, 1, 2)).reshape(cout, kh * kw * cin)


def _block_diag_hwio(ws):
    # Four branch convs fused into one block-diagonal conv (= conv + concat).
    kh, kw, cin, c4 = ws[0].shape
    nb = len(ws)
    out = jnp.zeros((kh, kw, nb * cin, nb * c4), jnp.float32)
    for i, w in enumerate(ws):
        out = out.at[:, :, i * cin:(i + 1) * cin, i * c4:(i + 1) * c4].set(w)
    return out


# ---------------------------------------------------------------------------
# WaveletVGGBlock (forward semantics of the PyTorch module, BN in eval mode)
# ---------------------------------------------------------------------------
class WaveletVGGBlockPallas:
    def __init__(self, in_channels, out_channels, wavelet_fn=None,
                 conv_more=False, key=None):
        # TODO(synk): wavelet_fn is stored but never used in WaveletVGGBlock.forward
        # (matches PyTorch); the full WaveletVGG2 additionally stacks these blocks
        # with plain VGGBlocks and a final Linear classifier.
        self.wavelet_fn = wavelet_fn
        self.conv_more = conv_more
        self.out_channels = out_channels
        if key is None:
            key = jax.random.PRNGKey(0)
        keys = jax.random.split(key, 6)
        c4 = out_channels // 4
        self.branches = [_make_conv_bn_params(keys[i], in_channels, c4)
                         for i in range(4)]
        self.p2 = _make_conv_bn_params(keys[4], out_channels, out_channels)
        self.p3 = (_make_conv_bn_params(keys[5], out_channels, out_channels)
                   if conv_more else None)

        # Four branch convs + channel concat == one conv with a block-diagonal
        # weight (the concat is just output-channel ordering).
        # TODO(synk): at real widths (c4 >= 32) run 4 per-branch matmuls into
        # output-channel slices instead -- the block-diagonal weight is 75%
        # structural zeros; at Cout=16 it is below MXU granularity and free.
        w1 = _block_diag_hwio([p["w"] for p in self.branches])
        s1 = jnp.concatenate([p["scale"] for p in self.branches])
        b1 = jnp.concatenate([p["bias"] for p in self.branches])

        def pack(w, s, b):
            # bf16 MXU operands; BN scale/bias stay f32 (applied on the VPU).
            return (_flatten_hwio(w).astype(jnp.bfloat16),
                    s.reshape(-1, 1), b.reshape(-1, 1))

        convs = [pack(w1, s1, b1),
                 pack(self.p2["w"], self.p2["scale"], self.p2["bias"])]
        if conv_more:
            convs.append(pack(self.p3["w"], self.p3["scale"], self.p3["bias"]))
        self.conv_params = convs

    def __call__(self, inputs_nchw):
        ll, lh, hl, hh = inputs_nchw
        N, Cin, H, W = ll.shape
        assert H % 2 == 0 and W % 2 == 0, "MaxPool2d(2,2) needs even H and W"
        HW = H * W
        Ho, Wo = H // 2, W // 2
        HoWo = Ho * Wo

        # Pack G samples along the lane axis so the pooled output slab is
        # >= 128 lanes wide (lane-dense vst).  16x16 inputs: G=2 -> 512-lane
        # compute, 128-lane output.
        G = 1 if HoWo >= 128 else -(-128 // HoWo)
        N_pad = -(-N // G) * G

        # NCHW -> (N, 4*Cin, H*W): channel concat + free reshape, no transposes.
        x = jnp.concatenate([ll, lh, hl, hh], axis=1).reshape(N, 4 * Cin, HW)
        if N_pad != N:
            x = jnp.pad(x, ((0, N_pad - N), (0, 0), (0, 0)))
        # (N_pad, C1, HW) -> (N_pad//G, C1, G*HW): sample g of a group owns
        # lanes [g*HW, (g+1)*HW).
        x = x.reshape(N_pad // G, G, 4 * Cin, HW).transpose(0, 2, 1, 3)
        x = x.reshape(N_pad // G, 4 * Cin, G * HW)

        masks = jnp.tile(_tap_masks(H, W), (1, G))            # (9, G*HW) f32
        sel = _pool_selector(H, W, G).astype(jnp.bfloat16)    # (G*HW, G*HoWo)

        out = _fused_block_call(x, self.conv_params, masks, sel, W=W)
        # (N_pad//G, Cout, G*HoWo) -> (N, Cout, Ho, Wo)
        out = out.reshape(N_pad // G, self.out_channels, G, HoWo)
        out = out.transpose(0, 2, 1, 3).reshape(N_pad, self.out_channels, Ho, Wo)
        return out[:N]


# ---------------------------------------------------------------------------
# Pure-JAX reference (unfused, HIGHEST precision, f32) for the correctness check
# ---------------------------------------------------------------------------
def _ref_conv_bn_relu(x, p):
    y = lax.conv_general_dilated(
        x, p["w"], (1, 1), "SAME",
        dimension_numbers=("NCHW", "HWIO", "NCHW"),
        precision=lax.Precision.HIGHEST)
    y = y * p["scale"][None, :, None, None] + p["bias"][None, :, None, None]
    return jnp.maximum(y, 0.0)


def _ref_forward(block, inputs_nchw):
    ll, lh, hl, hh = inputs_nchw
    outs = [_ref_conv_bn_relu(t, p)
            for t, p in zip((ll, lh, hl, hh), block.branches)]
    out = jnp.concatenate(outs, axis=1)
    out = _ref_conv_bn_relu(out, block.p2)
    if block.conv_more:
        out = _ref_conv_bn_relu(out, block.p3)
    return lax.reduce_window(out, -jnp.inf, lax.max,
                             (1, 1, 2, 2), (1, 1, 2, 2), "VALID")


if __name__ == "__main__":
    key = jax.random.PRNGKey(0)
    k_ll, k_lh, k_hl, k_hh, k_p1, k_p2 = jax.random.split(key, 6)

    N, Cin, H, W = 2, 4, 16, 16
    out_channels = 16

    inputs = (
        jax.random.normal(k_ll, (N, Cin, H, W), jnp.float32),
        jax.random.normal(k_lh, (N, Cin, H, W), jnp.float32),
        jax.random.normal(k_hl, (N, Cin, H, W), jnp.float32),
        jax.random.normal(k_hh, (N, Cin, H, W), jnp.float32),
    )

    # conv_more=False: 4 branch convs -> concat -> conv2 -> maxpool
    block = WaveletVGGBlockPallas(Cin, out_channels, wavelet_fn=None,
                                  conv_more=False, key=k_p1)
    out = jax.block_until_ready(block(inputs))
    assert out.shape == (N, out_channels, H // 2, W // 2), out.shape
    ref = jax.block_until_ready(_ref_forward(block, inputs))
    err = float(jnp.max(jnp.abs(out - ref)))
    # bf16 MXU operands (f32 accumulation) vs a HIGHEST-precision f32 reference
    # -> documented tolerance.
    assert jnp.allclose(out, ref, rtol=4e-2, atol=4e-2), err

    # conv_more=True path (extra conv3 before the pool), same fused kernel
    block3 = WaveletVGGBlockPallas(Cin, out_channels, wavelet_fn=None,
                                   conv_more=True, key=k_p2)
    out3 = jax.block_until_ready(block3(inputs))
    ref3 = jax.block_until_ready(_ref_forward(block3, inputs))
    err3 = float(jnp.max(jnp.abs(out3 - ref3)))
    assert jnp.allclose(out3, ref3, rtol=4e-2, atol=4e-2), err3

    print("KERNEL_OK")
</pallas_src>

<mosaic_0001>
module attributes {stable_mosaic.version = 11 : i64} {
  func.func @_roll_probe_kernel(%arg0: memref<8x128xf32, #tpu.memory_space<vmem>>, %arg1: memref<8x128xf32, #tpu.memory_space<vmem>>) attributes {dimension_semantics = [], scalar_prefetch = 0 : i64, scratch_operands = 0 : i64, tpu.core_type = #tpu.core_type<tc>} {
    %c0 = arith.constant 0 : index
    %c0_0 = arith.constant 0 : index
    %0 = vector.load %arg0[%c0, %c0_0] : memref<8x128xf32, #tpu.memory_space<vmem>>, vector<8x128xf32>
    %c1_i32 = arith.constant 1 : i32
    %1 = tpu.dynamic_rotate %0 by %c1_i32 dim 1 : vector<8x128xf32>, i32 -> vector<8x128xf32>
    %c0_1 = arith.constant 0 : index
    %c0_2 = arith.constant 0 : index
    %2 = vector.load %arg1[%c0_1, %c0_2] : memref<8x128xf32, #tpu.memory_space<vmem>>, vector<8x128xf32>
    tpu.vector_store %arg1[%c0_1, %c0_2], %1 {strides = array<i32>} : memref<8x128xf32, #tpu.memory_space<vmem>>, vector<8x128xf32>,
    return
  }
}

</mosaic_0001>

<llo_original>
// kernel: tpu_custom_call.1
$region0: #{tpu_custom_call.1}
  #allocation0 [shape = 'u32[]', space=smem, size = 0x4, offset = 0x4, fixed_abs, tag = 'smem constant byte address 0x4 - core index']
  #allocation1 [shape = 'u32[144,128]{1,0:T(1,128)}', space=vmem, size = 0x12000, scoped, tag = 'internal scratch']
  %s0 = inlined_call_operand.hbm [shape: f32[8,128], index: 0, kind: input, shape index: {}]
  %s1 = inlined_call_operand.hbm [shape: f32[8,128], index: 1, kind: output, shape index: {}]
  %s2 = sld [smem:[#allocation0]]
  $region18: #{tpu_custom_call.1} parent=0
    _
  %s4 = ssub.s32 1, %s2
  %s5 = scalar_select 0, %s4, %s2
  $region1: #{tpu_custom_call.1} parent=0
    #allocation2 [shape = 'u8[4096]{0}', space=vmem, size = 0x1000, scoped, tag = 'input window, operand 0, single buffered']
    #allocation3 [shape = 's32[1]{0}', space=sflag, size = 0x4, scoped, tag = 'scoped memory for tpu_custom_call.1']
    #allocation4 [shape = 's32[1]{0}', space=sflag, size = 0x4, scoped, tag = 'scoped memory for tpu_custom_call.1']
    #allocation5 [shape = 'u8[4096]{0}', space=vmem, size = 0x1000, scoped, tag = 'output window, operand 0, single buffered']
    %6 = vsyncpa [#allocation3], 0
    %7 = vsyncpa [#allocation4], 0
    // Predicated region
    $region2: #{tpu_custom_call.1} parent=1 // pred_check
      _
    $region3: #{tpu_custom_call.1} parent=1 // pred_check_branch
      %9 = sbr.rel (0) target = $region5
    $region4: #{tpu_custom_call.1} parent=1 // pred_region
      %s11 = ssub.s32 128, 128
      %12 = vsyncadd [#allocation3], %s11
      %s14 = sshll.u32 [#allocation2], 4
      %s15 = int_to_ptr.vmem [resolvable:$true] %s14
      %17 = dma.hbm_to_vmem [thread:$0]  %s0, 128, %s15, [#allocation3]
    $region5: #{tpu_custom_call.1} parent=1 // pred_fallthru
      _
    // Predicated region
    $region6: #{tpu_custom_call.1} parent=1 // pred_check
      _
    $region7: #{tpu_custom_call.1} parent=1 // pred_check_branch
      %19 = sbr.rel (0) target = $region9
    $region8: #{tpu_custom_call.1} parent=1 // pred_region
      %20 = dma.done [#allocation3], 128
    $region9: #{tpu_custom_call.1} parent=1 // pred_fallthru
      _
    %v21 = vld [vmem:[#allocation2] sm:$0xff]
    %22 = vrot.lane.b32.xlu0 %v21, 1
    %v23 = vpop.permute.xlu0 %22
    %24 = vst [vmem:[#allocation5] sm:$0xff] %v23
    // Predicated region
    $region10: #{tpu_custom_call.1} parent=1 // pred_check
      _
    $region11: #{tpu_custom_call.1} parent=1 // pred_check_branch
      %26 = sbr.rel (0) target = $region13
    $region12: #{tpu_custom_call.1} parent=1 // pred_region
      %s28 = ssub.s32 128, 128
      %29 = vsyncadd [#allocation4], %s28
      %s31 = sshll.u32 [#allocation5], 4
      %s32 = int_to_ptr.vmem [resolvable:$true] %s31
      %34 = dma.vmem_to_hbm [thread:$0]  %s32, 128, %s1, [#allocation4]
    $region13: #{tpu_custom_call.1} parent=1 // pred_fallthru
      _
    // Predicated region
    $region14: #{tpu_custom_call.1} parent=1 // pred_check
      _
    $region15: #{tpu_custom_call.1} parent=1 // pred_check_branch
      %36 = sbr.rel (0) target = $region17
    $region16: #{tpu_custom_call.1} parent=1 // pred_region
      %37 = dma.done [#allocation4], 128
    $region17: #{tpu_custom_call.1} parent=1 // pred_fallthru
      _
    %38 = vsyncpa [#allocation3], 1
    %39 = vsyncpa [#allocation4], 1

</llo_original>
